<compile_context>
chip_gen: v6e
topology: v6e:2x2x1
jax: 0.10.0
libtpu: 0.0.40
codegen_flags: <defaults>
</compile_context>

<pallas_src>
import functools

import jax
import jax.numpy as jnp
import numpy as np
from jax import lax
from jax.experimental import pallas as pl
from jax.experimental.pallas import tpu as pltpu


def bert_embed_kernel(ids_ref,                 # [B*S] int32 scalar-prefetch (SMEM)
                      tids_ref,                # (1, TQ, 1) f32 segment ids block
                      tok_hbm,                 # (V, H) token table, left in HBM
                      seg_ref,                 # (2, H) f32 segment table, VMEM resident
                      pos_ref,                 # (P, H) f32 position table, VMEM resident
                      gamma_ref, beta_ref,     # (1, H) f32 LayerNorm affine
                      o_ref,                   # (1, TQ, H) output block
                      tok_buf,                 # VMEM scratch (2, TQ, H) (double buffer)
                      sems,                    # DMA semaphores (2,) -- ONE per slot
                      *, seq_len):
    b = pl.program_id(0)
    st = pl.program_id(1)
    nt = pl.num_programs(1)
    tq = o_ref.shape[1]
    hidden = o_ref.shape[2]

    def issue_tile(batch, stile, slot):
        # Launch TQ independent row copies, all signalling the SAME per-slot semaphore.
        # Fully unrolled (tq is static) so the LLO scheduler can co-issue the SMEM id
        # load, descriptor build and start across iterations.
        base = pl.multiple_of(batch * seq_len + stile * tq, tq)
        for t in range(tq):
            row = ids_ref[base + t]
            pltpu.make_async_copy(
                tok_hbm.at[pl.ds(row, 1)],          # (1, H) source row in HBM
                tok_buf.at[slot, pl.ds(t, 1)],      # (1, H) destination row in VMEM
                sems.at[slot],
            ).start()

    def wait_tile(slot):
        # Single wait sized for the whole (TQ, H) tile: the DMA semaphore counts bytes
        # and the TQ row copies above signalled exactly TQ*H*itemsize in total.
        pltpu.make_async_copy(
            tok_hbm.at[pl.ds(0, tq)],               # placeholder source (sizes only)
            tok_buf.at[slot],
            sems.at[slot],
        ).wait()

    slot = st % 2

    # Prime the first tile of this batch row (fires once per row, so it stays correct
    # when the batch axis is sharded across TensorCores).
    @pl.when(st == 0)
    def _():
        issue_tile(b, st, slot)

    # Prefetch the next sequence tile of the same batch row into the other buffer.
    @pl.when(st + 1 < nt)
    def _():
        issue_tile(b, st + 1, 1 - slot)

    # Wait for the current tile's gather, then do the fused add + LayerNorm.
    wait_tile(slot)

    x = tok_buf[slot].astype(jnp.float32)           # (TQ, H) gathered token rows

    # Position rows [st*tq, st*tq + tq) sliced from the resident table (no re-DMA).
    pstart = pl.multiple_of(st * tq, tq)
    pos = pos_ref[pl.ds(pstart, tq), :]

    # Segment embedding as an FMA off the resident 2-row table:
    #   seg(t) = seg0 + type_id(t) * (seg1 - seg0),  type_id in {0., 1.}
    seg0 = seg_ref[0:1, :]
    seg_diff = seg_ref[1:2, :] - seg0
    tcol = tids_ref[...].reshape(tq, 1)
    h = x + pos + seg0 + tcol * seg_diff            # (TQ, H)

    # Single-pass LayerNorm statistics: var = E[x^2] - mu^2, clamped >= 0 for fp32 safety.
    inv_h = 1.0 / float(hidden)
    s1 = jnp.sum(h, axis=-1, keepdims=True)
    s2 = jnp.sum(h * h, axis=-1, keepdims=True)
    mu = s1 * inv_h
    var = jnp.maximum(s2 * inv_h - mu * mu, 0.0)
    y = (h - mu) * lax.rsqrt(var + 1e-12)
    out = y * gamma_ref[...] + beta_ref[...]

    o_ref[...] = out.reshape(o_ref.shape).astype(o_ref.dtype)


def _pick_tile(seq_len, block_s):
    # Largest multiple-of-8 divisor of S not exceeding block_s.
    cands = [t for t in range(8, min(block_s, seq_len) + 1, 8) if seq_len % t == 0]
    assert cands, "S must be a multiple of 8"
    return max(cands)


def bert_embedding(input_ids, input_type_ids,
                   token_emb, segment_emb, position_emb,
                   gamma, beta, *, block_s=256, out_dtype=jnp.float32):
    B, S = input_ids.shape
    V, H = token_emb.shape
    P = position_emb.shape[0]
    assert segment_emb.shape[0] == 2, "BERT uses exactly 2 segments"
    assert S <= P, "sequence length exceeds max_position_embeddings"

    tq = _pick_tile(S, block_s)
    nt = S // tq
    assert V >= tq  # needed only for the placeholder source shape in wait_tile

    ids_flat = input_ids.astype(jnp.int32).reshape(B * S)          # 1D -> no SMEM padding
    tids_f = input_type_ids.astype(jnp.float32).reshape(B, S, 1)   # {0.,1.} per token
    seg_f = segment_emb.astype(jnp.float32)
    pos_f = position_emb.astype(jnp.float32)
    gamma2 = gamma.reshape(1, H).astype(jnp.float32)
    beta2 = beta.reshape(1, H).astype(jnp.float32)

    kernel = functools.partial(bert_embed_kernel, seq_len=S)

    grid_spec = pltpu.PrefetchScalarGridSpec(
        num_scalar_prefetch=1,
        grid=(B, nt),
        in_specs=[
            # segment ids for this tile (lane dim == full dim 1, sublane = TQ mult. of 8)
            pl.BlockSpec((1, tq, 1), lambda b, st, ids: (b, st, 0)),
            # token table stays in HBM; gathered manually with async copies
            pl.BlockSpec(memory_space=pl.ANY),
            # tiny segment table: resident in VMEM, same block every step
            pl.BlockSpec((2, H), lambda b, st, ids: (0, 0)),
            # full position table resident in VMEM (constant block -> DMA'd once)
            pl.BlockSpec((P, H), lambda b, st, ids: (0, 0)),
            # LayerNorm gamma / beta
            pl.BlockSpec((1, H), lambda b, st, ids: (0, 0)),
            pl.BlockSpec((1, H), lambda b, st, ids: (0, 0)),
        ],
        out_specs=pl.BlockSpec((1, tq, H), lambda b, st, ids: (b, st, 0)),
        scratch_shapes=[
            pltpu.VMEM((2, tq, H), token_emb.dtype),   # double-buffered gather destination
            pltpu.SemaphoreType.DMA((2,)),             # ONE semaphore per buffer slot
        ],
    )

    return pl.pallas_call(
        kernel,
        out_shape=jax.ShapeDtypeStruct((B, S, H), out_dtype),
        grid_spec=grid_spec,
        compiler_params=pltpu.CompilerParams(
            # batch axis shards across TensorCores (v7x); sequence axis must stay
            # in-order so the cross-step prefetch chain is valid.
            dimension_semantics=("parallel", "arbitrary")),
    )(ids_flat, tids_f, token_emb, seg_f, pos_f, gamma2, beta2)


def bert_embedding_ref(input_ids, input_type_ids,
                       token_emb, segment_emb, position_emb,
                       gamma, beta):
    # pure-JAX reference (same math as the PyTorch module)
    B, S = input_ids.shape
    x = token_emb[input_ids]                     # [B,S,H]
    s = segment_emb[input_type_ids]              # [B,S,H]
    p = jnp.broadcast_to(position_emb[:S][None], x.shape)
    h = x + s + p
    mu = jnp.mean(h, axis=-1, keepdims=True)
    var = jnp.mean(jnp.square(h - mu), axis=-1, keepdims=True)
    return (h - mu) / jnp.sqrt(var + 1e-12) * gamma + beta


if __name__ == "__main__":
    # small synthetic config (structure of BertEmbedding.__init__)
    token_vocab_size = 96
    segment_vocab_size = 2
    hidden_size = 128           # lane-aligned hidden size
    max_position_embeddings = 64
    initializer_range = 0.02

    B, S = 2, 32

    key = jax.random.PRNGKey(0)
    k_tok, k_seg, k_pos, k_ids, k_tids, k_g, k_b = jax.random.split(key, 7)

    # NOTE: padding_idx=0 row is overwritten by normal_ init in the original
    # module, so no special zeroing is needed for forward semantics.
    token_emb = initializer_range * jax.random.normal(
        k_tok, (token_vocab_size, hidden_size), dtype=jnp.float32)
    segment_emb = initializer_range * jax.random.normal(
        k_seg, (segment_vocab_size, hidden_size), dtype=jnp.float32)
    position_emb = initializer_range * jax.random.normal(
        k_pos, (max_position_embeddings, hidden_size), dtype=jnp.float32)
    gamma = 1.0 + 0.1 * jax.random.normal(k_g, (hidden_size,), dtype=jnp.float32)
    beta = 0.05 * jax.random.normal(k_b, (hidden_size,), dtype=jnp.float32)

    input_ids = jax.random.randint(k_ids, (B, S), 0, token_vocab_size, dtype=jnp.int32)
    input_type_ids = jax.random.randint(k_tids, (B, S), 0, segment_vocab_size, dtype=jnp.int32)

    ref = bert_embedding_ref(input_ids, input_type_ids,
                             token_emb, segment_emb, position_emb, gamma, beta)

    # Run twice: small tile (exercises the multi-tile prefetch chain + double buffering)
    # and the default large tile (single tile per row).
    for bs in (8, 256):
        out = bert_embedding(input_ids, input_type_ids,
                             token_emb, segment_emb, position_emb, gamma, beta,
                             block_s=bs)
        out = jax.block_until_ready(out)
        np.testing.assert_allclose(np.asarray(out), np.asarray(ref),
                                   atol=1e-5, rtol=1e-4)

    print("KERNEL_OK")
</pallas_src>

<mosaic_0001>
module attributes {stable_mosaic.version = 11 : i64} {
  func.func @bert_embed_kernel(%arg0: i32, %arg1: i32, %arg2: memref<64xi32, #tpu.memory_space<smem>>, %arg3: memref<1x8x1xf32, #tpu.memory_space<vmem>>, %arg4: memref<96x128xf32, #tpu.memory_space<any>>, %arg5: memref<2x128xf32, #tpu.memory_space<vmem>>, %arg6: memref<64x128xf32, #tpu.memory_space<vmem>>, %arg7: memref<1x128xf32, #tpu.memory_space<vmem>>, %arg8: memref<1x128xf32, #tpu.memory_space<vmem>>, %arg9: memref<1x8x128xf32, #tpu.memory_space<vmem>>, %arg10: memref<2x8x128xf32, #tpu.memory_space<vmem>>, %arg11: memref<2x!tpu.dma_semaphore, #tpu.memory_space<semaphore_mem>>) attributes {dimension_semantics = [#tpu.dimension_semantics<parallel>, #tpu.dimension_semantics<arbitrary>], iteration_bounds = array<i64: 2, 4>, scalar_prefetch = 1 : i64, scratch_operands = 2 : i64, tpu.core_type = #tpu.core_type<tc>, window_params = [{transform_indices = @transform_0, window_bounds = array<i64: 1, 8, 1>}, {}, {pipeline_mode = #tpu.pipeline_mode<synchronous>, transform_indices = @transform_2, window_bounds = array<i64: 2, 128>}, {pipeline_mode = #tpu.pipeline_mode<synchronous>, transform_indices = @transform_3, window_bounds = array<i64: 64, 128>}, {pipeline_mode = #tpu.pipeline_mode<synchronous>, transform_indices = @transform_4, window_bounds = array<i64: 1, 128>}, {pipeline_mode = #tpu.pipeline_mode<synchronous>, transform_indices = @transform_5, window_bounds = array<i64: 1, 128>}, {transform_indices = @transform_6, window_bounds = array<i64: 1, 8, 128>}]} {
    %c2_i32 = arith.constant 2 : i32
    %c0_i32 = arith.constant 0 : i32
    %0 = arith.cmpi eq, %c2_i32, %c0_i32 : i32
    %c1_i32 = arith.constant 1 : i32
    %1 = arith.select %0, %c1_i32, %c2_i32 : i32
    %2 = arith.remsi %arg1, %1 : i32
    %c0_i32_0 = arith.constant 0 : i32
    %3 = arith.cmpi ne, %2, %c0_i32_0 : i32
    %c0_i32_1 = arith.constant 0 : i32
    %4 = arith.cmpi slt, %2, %c0_i32_1 : i32
    %c0_i32_2 = arith.constant 0 : i32
    %5 = arith.cmpi slt, %1, %c0_i32_2 : i32
    %6 = arith.xori %4, %5 : i1
    %7 = arith.andi %6, %3 : i1
    %8 = arith.addi %2, %1 : i32
    %9 = arith.select %7, %8, %2 : i32
    %c0_i32_3 = arith.constant 0 : i32
    %10 = arith.cmpi eq, %arg1, %c0_i32_3 : i32
    %11 = arith.extui %10 : i1 to i32
    %c0_i32_4 = arith.constant 0 : i32
    %12 = arith.cmpi ne, %11, %c0_i32_4 : i32
    scf.if %12 {
      %c32_i32 = arith.constant 32 : i32
      %69 = arith.muli %arg0, %c32_i32 : i32
      %c8_i32_31 = arith.constant 8 : i32
      %70 = arith.muli %arg1, %c8_i32_31 : i32
      %71 = arith.addi %69, %70 : i32
      %72 = tpu.assume_multiple %71, 8 : i32
      %c0_i32_32 = arith.constant 0 : i32
      %73 = arith.addi %72, %c0_i32_32 : i32
      %74 = arith.index_cast %73 : i32 to index
      %75 = memref.load %arg2[%74] : memref<64xi32, #tpu.memory_space<smem>>
      %c0_i32_33 = arith.constant 0 : i32
      %76 = tpu.memref_slice %arg4[%75, %c0_i32_33] : memref<96x128xf32, #tpu.memory_space<any>> -> memref<1x128xf32, #tpu.memory_space<any>>
      %c0_i32_34 = arith.constant 0 : i32
      %c0_i32_35 = arith.constant 0 : i32
      %77 = tpu.memref_slice %arg10[%9, %c0_i32_34, %c0_i32_35] : memref<2x8x128xf32, #tpu.memory_space<vmem>> -> memref<1x1x128xf32, #tpu.memory_space<vmem>>
      %78 = tpu.memref_squeeze %77 : memref<1x1x128xf32, #tpu.memory_space<vmem>> -> memref<1x128xf32, #tpu.memory_space<vmem>>
      %79 = tpu.memref_slice %arg11[%9] : memref<2x!tpu.dma_semaphore, #tpu.memory_space<semaphore_mem>> -> memref<1x!tpu.dma_semaphore, #tpu.memory_space<semaphore_mem>>
      %80 = tpu.memref_squeeze %79 : memref<1x!tpu.dma_semaphore, #tpu.memory_space<semaphore_mem>> -> memref<!tpu.dma_semaphore, #tpu.memory_space<semaphore_mem>>
      tpu.enqueue_dma source(%76 : memref<1x128xf32, #tpu.memory_space<any>>) target(%78 : memref<1x128xf32, #tpu.memory_space<vmem>>) target_semaphore(%80 : memref<!tpu.dma_semaphore, #tpu.memory_space<semaphore_mem>>)
      %c1_i32_36 = arith.constant 1 : i32
      %81 = arith.addi %72, %c1_i32_36 : i32
      %82 = arith.index_cast %81 : i32 to index
      %83 = memref.load %arg2[%82] : memref<64xi32, #tpu.memory_space<smem>>
      %c0_i32_37 = arith.constant 0 : i32
      %84 = tpu.memref_slice %arg4[%83, %c0_i32_37] : memref<96x128xf32, #tpu.memory_space<any>> -> memref<1x128xf32, #tpu.memory_space<any>>
      %c1_i32_38 = arith.constant 1 : i32
      %c0_i32_39 = arith.constant 0 : i32
      %85 = tpu.memref_slice %arg10[%9, %c1_i32_38, %c0_i32_39] : memref<2x8x128xf32, #tpu.memory_space<vmem>> -> memref<1x1x128xf32, #tpu.memory_space<vmem>>
      %86 = tpu.memref_squeeze %85 : memref<1x1x128xf32, #tpu.memory_space<vmem>> -> memref<1x128xf32, #tpu.memory_space<vmem>>
      %87 = tpu.memref_slice %arg11[%9] : memref<2x!tpu.dma_semaphore, #tpu.memory_space<semaphore_mem>> -> memref<1x!tpu.dma_semaphore, #tpu.memory_space<semaphore_mem>>
      %88 = tpu.memref_squeeze %87 : memref<1x!tpu.dma_semaphore, #tpu.memory_space<semaphore_mem>> -> memref<!tpu.dma_semaphore, #tpu.memory_space<semaphore_mem>>
      tpu.enqueue_dma source(%84 : memref<1x128xf32, #tpu.memory_space<any>>) target(%86 : memref<1x128xf32, #tpu.memory_space<vmem>>) target_semaphore(%88 : memref<!tpu.dma_semaphore, #tpu.memory_space<semaphore_mem>>)
      %c2_i32_40 = arith.constant 2 : i32
      %89 = arith.addi %72, %c2_i32_40 : i32
      %90 = arith.index_cast %89 : i32 to index
      %91 = memref.load %arg2[%90] : memref<64xi32, #tpu.memory_space<smem>>
      %c0_i32_41 = arith.constant 0 : i32
      %92 = tpu.memref_slice %arg4[%91, %c0_i32_41] : memref<96x128xf32, #tpu.memory_space<any>> -> memref<1x128xf32, #tpu.memory_space<any>>
      %c2_i32_42 = arith.constant 2 : i32
      %c0_i32_43 = arith.constant 0 : i32
      %93 = tpu.memref_slice %arg10[%9, %c2_i32_42, %c0_i32_43] : memref<2x8x128xf32, #tpu.memory_space<vmem>> -> memref<1x1x128xf32, #tpu.memory_space<vmem>>
      %94 = tpu.memref_squeeze %93 : memref<1x1x128xf32, #tpu.memory_space<vmem>> -> memref<1x128xf32, #tpu.memory_space<vmem>>
      %95 = tpu.memref_slice %arg11[%9] : memref<2x!tpu.dma_semaphore, #tpu.memory_space<semaphore_mem>> -> memref<1x!tpu.dma_semaphore, #tpu.memory_space<semaphore_mem>>
      %96 = tpu.memref_squeeze %95 : memref<1x!tpu.dma_semaphore, #tpu.memory_space<semaphore_mem>> -> memref<!tpu.dma_semaphore, #tpu.memory_space<semaphore_mem>>
      tpu.enqueue_dma source(%92 : memref<1x128xf32, #tpu.memory_space<any>>) target(%94 : memref<1x128xf32, #tpu.memory_space<vmem>>) target_semaphore(%96 : memref<!tpu.dma_semaphore, #tpu.memory_space<semaphore_mem>>)
      %c3_i32 = arith.constant 3 : i32
      %97 = arith.addi %72, %c3_i32 : i32
      %98 = arith.index_cast %97 : i32 to index
      %99 = memref.load %arg2[%98] : memref<64xi32, #tpu.memory_space<smem>>
      %c0_i32_44 = arith.constant 0 : i32
      %100 = tpu.memref_slice %arg4[%99, %c0_i32_44] : memref<96x128xf32, #tpu.memory_space<any>> -> memref<1x128xf32, #tpu.memory_space<any>>
      %c3_i32_45 = arith.constant 3 : i32
      %c0_i32_46 = arith.constant 0 : i32
      %101 = tpu.memref_slice %arg10[%9, %c3_i32_45, %c0_i32_46] : memref<2x8x128xf32, #tpu.memory_space<vmem>> -> memref<1x1x128xf32, #tpu.memory_space<vmem>>
      %102 = tpu.memref_squeeze %101 : memref<1x1x128xf32, #tpu.memory_space<vmem>> -> memref<1x128xf32, #tpu.memory_space<vmem>>
      %103 = tpu.memref_slice %arg11[%9] : memref<2x!tpu.dma_semaphore, #tpu.memory_space<semaphore_mem>> -> memref<1x!tpu.dma_semaphore, #tpu.memory_space<semaphore_mem>>
      %104 = tpu.memref_squeeze %103 : memref<1x!tpu.dma_semaphore, #tpu.memory_space<semaphore_mem>> -> memref<!tpu.dma_semaphore, #tpu.memory_space<semaphore_mem>>
      tpu.enqueue_dma source(%100 : memref<1x128xf32, #tpu.memory_space<any>>) target(%102 : memref<1x128xf32, #tpu.memory_space<vmem>>) target_semaphore(%104 : memref<!tpu.dma_semaphore, #tpu.memory_space<semaphore_mem>>)
      %c4_i32_47 = arith.constant 4 : i32
      %105 = arith.addi %72, %c4_i32_47 : i32
      %106 = arith.index_cast %105 : i32 to index
      %107 = memref.load %arg2[%106] : memref<64xi32, #tpu.memory_space<smem>>
      %c0_i32_48 = arith.constant 0 : i32
      %108 = tpu.memref_slice %arg4[%107, %c0_i32_48] : memref<96x128xf32, #tpu.memory_space<any>> -> memref<1x128xf32, #tpu.memory_space<any>>
      %c4_i32_49 = arith.constant 4 : i32
      %c0_i32_50 = arith.constant 0 : i32
      %109 = tpu.memref_slice %arg10[%9, %c4_i32_49, %c0_i32_50] : memref<2x8x128xf32, #tpu.memory_space<vmem>> -> memref<1x1x128xf32, #tpu.memory_space<vmem>>
      %110 = tpu.memref_squeeze %109 : memref<1x1x128xf32, #tpu.memory_space<vmem>> -> memref<1x128xf32, #tpu.memory_space<vmem>>
      %111 = tpu.memref_slice %arg11[%9] : memref<2x!tpu.dma_semaphore, #tpu.memory_space<semaphore_mem>> -> memref<1x!tpu.dma_semaphore, #tpu.memory_space<semaphore_mem>>
      %112 = tpu.memref_squeeze %111 : memref<1x!tpu.dma_semaphore, #tpu.memory_space<semaphore_mem>> -> memref<!tpu.dma_semaphore, #tpu.memory_space<semaphore_mem>>
      tpu.enqueue_dma source(%108 : memref<1x128xf32, #tpu.memory_space<any>>) target(%110 : memref<1x128xf32, #tpu.memory_space<vmem>>) target_semaphore(%112 : memref<!tpu.dma_semaphore, #tpu.memory_space<semaphore_mem>>)
      %c5_i32 = arith.constant 5 : i32
      %113 = arith.addi %72, %c5_i32 : i32
      %114 = arith.index_cast %113 : i32 to index
      %115 = memref.load %arg2[%114] : memref<64xi32, #tpu.memory_space<smem>>
      %c0_i32_51 = arith.constant 0 : i32
      %116 = tpu.memref_slice %arg4[%115, %c0_i32_51] : memref<96x128xf32, #tpu.memory_space<any>> -> memref<1x128xf32, #tpu.memory_space<any>>
      %c5_i32_52 = arith.constant 5 : i32
      %c0_i32_53 = arith.constant 0 : i32
      %117 = tpu.memref_slice %arg10[%9, %c5_i32_52, %c0_i32_53] : memref<2x8x128xf32, #tpu.memory_space<vmem>> -> memref<1x1x128xf32, #tpu.memory_space<vmem>>
      %118 = tpu.memref_squeeze %117 : memref<1x1x128xf32, #tpu.memory_space<vmem>> -> memref<1x128xf32, #tpu.memory_space<vmem>>
      %119 = tpu.memref_slice %arg11[%9] : memref<2x!tpu.dma_semaphore, #tpu.memory_space<semaphore_mem>> -> memref<1x!tpu.dma_semaphore, #tpu.memory_space<semaphore_mem>>
      %120 = tpu.memref_squeeze %119 : memref<1x!tpu.dma_semaphore, #tpu.memory_space<semaphore_mem>> -> memref<!tpu.dma_semaphore, #tpu.memory_space<semaphore_mem>>
      tpu.enqueue_dma source(%116 : memref<1x128xf32, #tpu.memory_space<any>>) target(%118 : memref<1x128xf32, #tpu.memory_space<vmem>>) target_semaphore(%120 : memref<!tpu.dma_semaphore, #tpu.memory_space<semaphore_mem>>)
      %c6_i32 = arith.constant 6 : i32
      %121 = arith.addi %72, %c6_i32 : i32
      %122 = arith.index_cast %121 : i32 to index
      %123 = memref.load %arg2[%122] : memref<64xi32, #tpu.memory_space<smem>>
      %c0_i32_54 = arith.constant 0 : i32
      %124 = tpu.memref_slice %arg4[%123, %c0_i32_54] : memref<96x128xf32, #tpu.memory_space<any>> -> memref<1x128xf32, #tpu.memory_space<any>>
      %c6_i32_55 = arith.constant 6 : i32
      %c0_i32_56 = arith.constant 0 : i32
      %125 = tpu.memref_slice %arg10[%9, %c6_i32_55, %c0_i32_56] : memref<2x8x128xf32, #tpu.memory_space<vmem>> -> memref<1x1x128xf32, #tpu.memory_space<vmem>>
      %126 = tpu.memref_squeeze %125 : memref<1x1x128xf32, #tpu.memory_space<vmem>> -> memref<1x128xf32, #tpu.memory_space<vmem>>
      %127 = tpu.memref_slice %arg11[%9] : memref<2x!tpu.dma_semaphore, #tpu.memory_space<semaphore_mem>> -> memref<1x!tpu.dma_semaphore, #tpu.memory_space<semaphore_mem>>
      %128 = tpu.memref_squeeze %127 : memref<1x!tpu.dma_semaphore, #tpu.memory_space<semaphore_mem>> -> memref<!tpu.dma_semaphore, #tpu.memory_space<semaphore_mem>>
      tpu.enqueue_dma source(%124 : memref<1x128xf32, #tpu.memory_space<any>>) target(%126 : memref<1x128xf32, #tpu.memory_space<vmem>>) target_semaphore(%128 : memref<!tpu.dma_semaphore, #tpu.memory_space<semaphore_mem>>)
      %c7_i32 = arith.constant 7 : i32
      %129 = arith.addi %72, %c7_i32 : i32
      %130 = arith.index_cast %129 : i32 to index
      %131 = memref.load %arg2[%130] : memref<64xi32, #tpu.memory_space<smem>>
      %c0_i32_57 = arith.constant 0 : i32
      %132 = tpu.memref_slice %arg4[%131, %c0_i32_57] : memref<96x128xf32, #tpu.memory_space<any>> -> memref<1x128xf32, #tpu.memory_space<any>>
      %c7_i32_58 = arith.constant 7 : i32
      %c0_i32_59 = arith.constant 0 : i32
      %133 = tpu.memref_slice %arg10[%9, %c7_i32_58, %c0_i32_59] : memref<2x8x128xf32, #tpu.memory_space<vmem>> -> memref<1x1x128xf32, #tpu.memory_space<vmem>>
      %134 = tpu.memref_squeeze %133 : memref<1x1x128xf32, #tpu.memory_space<vmem>> -> memref<1x128xf32, #tpu.memory_space<vmem>>
      %135 = tpu.memref_slice %arg11[%9] : memref<2x!tpu.dma_semaphore, #tpu.memory_space<semaphore_mem>> -> memref<1x!tpu.dma_semaphore, #tpu.memory_space<semaphore_mem>>
      %136 = tpu.memref_squeeze %135 : memref<1x!tpu.dma_semaphore, #tpu.memory_space<semaphore_mem>> -> memref<!tpu.dma_semaphore, #tpu.memory_space<semaphore_mem>>
      tpu.enqueue_dma source(%132 : memref<1x128xf32, #tpu.memory_space<any>>) target(%134 : memref<1x128xf32, #tpu.memory_space<vmem>>) target_semaphore(%136 : memref<!tpu.dma_semaphore, #tpu.memory_space<semaphore_mem>>)
    } else {
    }
    %c1_i32_5 = arith.constant 1 : i32
    %13 = arith.addi %arg1, %c1_i32_5 : i32
    %c4_i32 = arith.constant 4 : i32
    %14 = arith.cmpi slt, %13, %c4_i32 : i32
    %15 = arith.extui %14 : i1 to i32
    %c0_i32_6 = arith.constant 0 : i32
    %16 = arith.cmpi ne, %15, %c0_i32_6 : i32
    scf.if %16 {
      %c1_i32_31 = arith.constant 1 : i32
      %69 = arith.addi %arg1, %c1_i32_31 : i32
      %c1_i32_32 = arith.constant 1 : i32
      %70 = arith.subi %c1_i32_32, %9 : i32
      %c32_i32 = arith.constant 32 : i32
      %71 = arith.muli %arg0, %c32_i32 : i32
      %c8_i32_33 = arith.constant 8 : i32
      %72 = arith.muli %69, %c8_i32_33 : i32
      %73 = arith.addi %71, %72 : i32
      %74 = tpu.assume_multiple %73, 8 : i32
      %c0_i32_34 = arith.constant 0 : i32
      %75 = arith.addi %74, %c0_i32_34 : i32
      %76 = arith.index_cast %75 : i32 to index
      %77 = memref.load %arg2[%76] : memref<64xi32, #tpu.memory_space<smem>>
      %c0_i32_35 = arith.constant 0 : i32
      %78 = tpu.memref_slice %arg4[%77, %c0_i32_35] : memref<96x128xf32, #tpu.memory_space<any>> -> memref<1x128xf32, #tpu.memory_space<any>>
      %c0_i32_36 = arith.constant 0 : i32
      %c0_i32_37 = arith.constant 0 : i32
      %79 = tpu.memref_slice %arg10[%70, %c0_i32_36, %c0_i32_37] : memref<2x8x128xf32, #tpu.memory_space<vmem>> -> memref<1x1x128xf32, #tpu.memory_space<vmem>>
      %80 = tpu.memref_squeeze %79 : memref<1x1x128xf32, #tpu.memory_space<vmem>> -> memref<1x128xf32, #tpu.memory_space<vmem>>
      %81 = tpu.memref_slice %arg11[%70] : memref<2x!tpu.dma_semaphore, #tpu.memory_space<semaphore_mem>> -> memref<1x!tpu.dma_semaphore, #tpu.memory_space<semaphore_mem>>
      %82 = tpu.memref_squeeze %81 : memref<1x!tpu.dma_semaphore, #tpu.memory_space<semaphore_mem>> -> memref<!tpu.dma_semaphore, #tpu.memory_space<semaphore_mem>>
      tpu.enqueue_dma source(%78 : memref<1x128xf32, #tpu.memory_space<any>>) target(%80 : memref<1x128xf32, #tpu.memory_space<vmem>>) target_semaphore(%82 : memref<!tpu.dma_semaphore, #tpu.memory_space<semaphore_mem>>)
      %c1_i32_38 = arith.constant 1 : i32
      %83 = arith.addi %74, %c1_i32_38 : i32
      %84 = arith.index_cast %83 : i32 to index
      %85 = memref.load %arg2[%84] : memref<64xi32, #tpu.memory_space<smem>>
      %c0_i32_39 = arith.constant 0 : i32
      %86 = tpu.memref_slice %arg4[%85, %c0_i32_39] : memref<96x128xf32, #tpu.memory_space<any>> -> memref<1x128xf32, #tpu.memory_space<any>>
      %c1_i32_40 = arith.constant 1 : i32
      %c0_i32_41 = arith.constant 0 : i32
      %87 = tpu.memref_slice %arg10[%70, %c1_i32_40, %c0_i32_41] : memref<2x8x128xf32, #tpu.memory_space<vmem>> -> memref<1x1x128xf32, #tpu.memory_space<vmem>>
      %88 = tpu.memref_squeeze %87 : memref<1x1x128xf32, #tpu.memory_space<vmem>> -> memref<1x128xf32, #tpu.memory_space<vmem>>
      %89 = tpu.memref_slice %arg11[%70] : memref<2x!tpu.dma_semaphore, #tpu.memory_space<semaphore_mem>> -> memref<1x!tpu.dma_semaphore, #tpu.memory_space<semaphore_mem>>
      %90 = tpu.memref_squeeze %89 : memref<1x!tpu.dma_semaphore, #tpu.memory_space<semaphore_mem>> -> memref<!tpu.dma_semaphore, #tpu.memory_space<semaphore_mem>>
      tpu.enqueue_dma source(%86 : memref<1x128xf32, #tpu.memory_space<any>>) target(%88 : memref<1x128xf32, #tpu.memory_space<vmem>>) target_semaphore(%90 : memref<!tpu.dma_semaphore, #tpu.memory_space<semaphore_mem>>)
      %c2_i32_42 = arith.constant 2 : i32
      %91 = arith.addi %74, %c2_i32_42 : i32
      %92 = arith.index_cast %91 : i32 to index
      %93 = memref.load %arg2[%92] : memref<64xi32, #tpu.memory_space<smem>>
      %c0_i32_43 = arith.constant 0 : i32
      %94 = tpu.memref_slice %arg4[%93, %c0_i32_43] : memref<96x128xf32, #tpu.memory_space<any>> -> memref<1x128xf32, #tpu.memory_space<any>>
      %c2_i32_44 = arith.constant 2 : i32
      %c0_i32_45 = arith.constant 0 : i32
      %95 = tpu.memref_slice %arg10[%70, %c2_i32_44, %c0_i32_45] : memref<2x8x128xf32, #tpu.memory_space<vmem>> -> memref<1x1x128xf32, #tpu.memory_space<vmem>>
      %96 = tpu.memref_squeeze %95 : memref<1x1x128xf32, #tpu.memory_space<vmem>> -> memref<1x128xf32, #tpu.memory_space<vmem>>
      %97 = tpu.memref_slice %arg11[%70] : memref<2x!tpu.dma_semaphore, #tpu.memory_space<semaphore_mem>> -> memref<1x!tpu.dma_semaphore, #tpu.memory_space<semaphore_mem>>
      %98 = tpu.memref_squeeze %97 : memref<1x!tpu.dma_semaphore, #tpu.memory_space<semaphore_mem>> -> memref<!tpu.dma_semaphore, #tpu.memory_space<semaphore_mem>>
      tpu.enqueue_dma source(%94 : memref<1x128xf32, #tpu.memory_space<any>>) target(%96 : memref<1x128xf32, #tpu.memory_space<vmem>>) target_semaphore(%98 : memref<!tpu.dma_semaphore, #tpu.memory_space<semaphore_mem>>)
      %c3_i32 = arith.constant 3 : i32
      %99 = arith.addi %74, %c3_i32 : i32
      %100 = arith.index_cast %99 : i32 to index
      %101 = memref.load %arg2[%100] : memref<64xi32, #tpu.memory_space<smem>>
      %c0_i32_46 = arith.constant 0 : i32
      %102 = tpu.memref_slice %arg4[%101, %c0_i32_46] : memref<96x128xf32, #tpu.memory_space<any>> -> memref<1x128xf32, #tpu.memory_space<any>>
      %c3_i32_47 = arith.constant 3 : i32
      %c0_i32_48 = arith.constant 0 : i32
      %103 = tpu.memref_slice %arg10[%70, %c3_i32_47, %c0_i32_48] : memref<2x8x128xf32, #tpu.memory_space<vmem>> -> memref<1x1x128xf32, #tpu.memory_space<vmem>>
      %104 = tpu.memref_squeeze %103 : memref<1x1x128xf32, #tpu.memory_space<vmem>> -> memref<1x128xf32, #tpu.memory_space<vmem>>
      %105 = tpu.memref_slice %arg11[%70] : memref<2x!tpu.dma_semaphore, #tpu.memory_space<semaphore_mem>> -> memref<1x!tpu.dma_semaphore, #tpu.memory_space<semaphore_mem>>
      %106 = tpu.memref_squeeze %105 : memref<1x!tpu.dma_semaphore, #tpu.memory_space<semaphore_mem>> -> memref<!tpu.dma_semaphore, #tpu.memory_space<semaphore_mem>>
      tpu.enqueue_dma source(%102 : memref<1x128xf32, #tpu.memory_space<any>>) target(%104 : memref<1x128xf32, #tpu.memory_space<vmem>>) target_semaphore(%106 : memref<!tpu.dma_semaphore, #tpu.memory_space<semaphore_mem>>)
      %c4_i32_49 = arith.constant 4 : i32
      %107 = arith.addi %74, %c4_i32_49 : i32
      %108 = arith.index_cast %107 : i32 to index
      %109 = memref.load %arg2[%108] : memref<64xi32, #tpu.memory_space<smem>>
      %c0_i32_50 = arith.constant 0 : i32
      %110 = tpu.memref_slice %arg4[%109, %c0_i32_50] : memref<96x128xf32, #tpu.memory_space<any>> -> memref<1x128xf32, #tpu.memory_space<any>>
      %c4_i32_51 = arith.constant 4 : i32
      %c0_i32_52 = arith.constant 0 : i32
      %111 = tpu.memref_slice %arg10[%70, %c4_i32_51, %c0_i32_52] : memref<2x8x128xf32, #tpu.memory_space<vmem>> -> memref<1x1x128xf32, #tpu.memory_space<vmem>>
      %112 = tpu.memref_squeeze %111 : memref<1x1x128xf32, #tpu.memory_space<vmem>> -> memref<1x128xf32, #tpu.memory_space<vmem>>
      %113 = tpu.memref_slice %arg11[%70] : memref<2x!tpu.dma_semaphore, #tpu.memory_space<semaphore_mem>> -> memref<1x!tpu.dma_semaphore, #tpu.memory_space<semaphore_mem>>
      %114 = tpu.memref_squeeze %113 : memref<1x!tpu.dma_semaphore, #tpu.memory_space<semaphore_mem>> -> memref<!tpu.dma_semaphore, #tpu.memory_space<semaphore_mem>>
      tpu.enqueue_dma source(%110 : memref<1x128xf32, #tpu.memory_space<any>>) target(%112 : memref<1x128xf32, #tpu.memory_space<vmem>>) target_semaphore(%114 : memref<!tpu.dma_semaphore, #tpu.memory_space<semaphore_mem>>)
      %c5_i32 = arith.constant 5 : i32
      %115 = arith.addi %74, %c5_i32 : i32
      %116 = arith.index_cast %115 : i32 to index
      %117 = memref.load %arg2[%116] : memref<64xi32, #tpu.memory_space<smem>>
      %c0_i32_53 = arith.constant 0 : i32
      %118 = tpu.memref_slice %arg4[%117, %c0_i32_53] : memref<96x128xf32, #tpu.memory_space<any>> -> memref<1x128xf32, #tpu.memory_space<any>>
      %c5_i32_54 = arith.constant 5 : i32
      %c0_i32_55 = arith.constant 0 : i32
      %119 = tpu.memref_slice %arg10[%70, %c5_i32_54, %c0_i32_55] : memref<2x8x128xf32, #tpu.memory_space<vmem>> -> memref<1x1x128xf32, #tpu.memory_space<vmem>>
      %120 = tpu.memref_squeeze %119 : memref<1x1x128xf32, #tpu.memory_space<vmem>> -> memref<1x128xf32, #tpu.memory_space<vmem>>
      %121 = tpu.memref_slice %arg11[%70] : memref<2x!tpu.dma_semaphore, #tpu.memory_space<semaphore_mem>> -> memref<1x!tpu.dma_semaphore, #tpu.memory_space<semaphore_mem>>
      %122 = tpu.memref_squeeze %121 : memref<1x!tpu.dma_semaphore, #tpu.memory_space<semaphore_mem>> -> memref<!tpu.dma_semaphore, #tpu.memory_space<semaphore_mem>>
      tpu.enqueue_dma source(%118 : memref<1x128xf32, #tpu.memory_space<any>>) target(%120 : memref<1x128xf32, #tpu.memory_space<vmem>>) target_semaphore(%122 : memref<!tpu.dma_semaphore, #tpu.memory_space<semaphore_mem>>)
      %c6_i32 = arith.constant 6 : i32
      %123 = arith.addi %74, %c6_i32 : i32
      %124 = arith.index_cast %123 : i32 to index
      %125 = memref.load %arg2[%124] : memref<64xi32, #tpu.memory_space<smem>>
      %c0_i32_56 = arith.constant 0 : i32
      %126 = tpu.memref_slice %arg4[%125, %c0_i32_56] : memref<96x128xf32, #tpu.memory_space<any>> -> memref<1x128xf32, #tpu.memory_space<any>>
      %c6_i32_57 = arith.constant 6 : i32
      %c0_i32_58 = arith.constant 0 : i32
      %127 = tpu.memref_slice %arg10[%70, %c6_i32_57, %c0_i32_58] : memref<2x8x128xf32, #tpu.memory_space<vmem>> -> memref<1x1x128xf32, #tpu.memory_space<vmem>>
      %128 = tpu.memref_squeeze %127 : memref<1x1x128xf32, #tpu.memory_space<vmem>> -> memref<1x128xf32, #tpu.memory_space<vmem>>
      %129 = tpu.memref_slice %arg11[%70] : memref<2x!tpu.dma_semaphore, #tpu.memory_space<semaphore_mem>> -> memref<1x!tpu.dma_semaphore, #tpu.memory_space<semaphore_mem>>
      %130 = tpu.memref_squeeze %129 : memref<1x!tpu.dma_semaphore, #tpu.memory_space<semaphore_mem>> -> memref<!tpu.dma_semaphore, #tpu.memory_space<semaphore_mem>>
      tpu.enqueue_dma source(%126 : memref<1x128xf32, #tpu.memory_space<any>>) target(%128 : memref<1x128xf32, #tpu.memory_space<vmem>>) target_semaphore(%130 : memref<!tpu.dma_semaphore, #tpu.memory_space<semaphore_mem>>)
      %c7_i32 = arith.constant 7 : i32
      %131 = arith.addi %74, %c7_i32 : i32
      %132 = arith.index_cast %131 : i32 to index
      %133 = memref.load %arg2[%132] : memref<64xi32, #tpu.memory_space<smem>>
      %c0_i32_59 = arith.constant 0 : i32
      %134 = tpu.memref_slice %arg4[%133, %c0_i32_59] : memref<96x128xf32, #tpu.memory_space<any>> -> memref<1x128xf32, #tpu.memory_space<any>>
      %c7_i32_60 = arith.constant 7 : i32
      %c0_i32_61 = arith.constant 0 : i32
      %135 = tpu.memref_slice %arg10[%70, %c7_i32_60, %c0_i32_61] : memref<2x8x128xf32, #tpu.memory_space<vmem>> -> memref<1x1x128xf32, #tpu.memory_space<vmem>>
      %136 = tpu.memref_squeeze %135 : memref<1x1x128xf32, #tpu.memory_space<vmem>> -> memref<1x128xf32, #tpu.memory_space<vmem>>
      %137 = tpu.memref_slice %arg11[%70] : memref<2x!tpu.dma_semaphore, #tpu.memory_space<semaphore_mem>> -> memref<1x!tpu.dma_semaphore, #tpu.memory_space<semaphore_mem>>
      %138 = tpu.memref_squeeze %137 : memref<1x!tpu.dma_semaphore, #tpu.memory_space<semaphore_mem>> -> memref<!tpu.dma_semaphore, #tpu.memory_space<semaphore_mem>>
      tpu.enqueue_dma source(%134 : memref<1x128xf32, #tpu.memory_space<any>>) target(%136 : memref<1x128xf32, #tpu.memory_space<vmem>>) target_semaphore(%138 : memref<!tpu.dma_semaphore, #tpu.memory_space<semaphore_mem>>)
    } else {
    }
    %c0_i32_7 = arith.constant 0 : i32
    %c0_i32_8 = arith.constant 0 : i32
    %17 = tpu.memref_slice %arg4[%c0_i32_7, %c0_i32_8] : memref<96x128xf32, #tpu.memory_space<any>> -> memref<8x128xf32, #tpu.memory_space<any>>
    %c0_i32_9 = arith.constant 0 : i32
    %c0_i32_10 = arith.constant 0 : i32
    %18 = tpu.memref_slice %arg10[%9, %c0_i32_9, %c0_i32_10] : memref<2x8x128xf32, #tpu.memory_space<vmem>> -> memref<1x8x128xf32, #tpu.memory_space<vmem>>
    %19 = tpu.memref_squeeze %18 : memref<1x8x128xf32, #tpu.memory_space<vmem>> -> memref<8x128xf32, #tpu.memory_space<vmem>>
    %20 = tpu.memref_slice %arg11[%9] : memref<2x!tpu.dma_semaphore, #tpu.memory_space<semaphore_mem>> -> memref<1x!tpu.dma_semaphore, #tpu.memory_space<semaphore_mem>>
    %21 = tpu.memref_squeeze %20 : memref<1x!tpu.dma_semaphore, #tpu.memory_space<semaphore_mem>> -> memref<!tpu.dma_semaphore, #tpu.memory_space<semaphore_mem>>
    tpu.wait_dma2 semaphore(%21 : memref<!tpu.dma_semaphore, #tpu.memory_space<semaphore_mem>>) src(%17 : memref<8x128xf32, #tpu.memory_space<any>>) dst(%19 : memref<8x128xf32, #tpu.memory_space<vmem>>)
    %22 = arith.index_cast %9 : i32 to index
    %c0 = arith.constant 0 : index
    %c0_11 = arith.constant 0 : index
    %23 = vector.load %arg10[%22, %c0, %c0_11] : memref<2x8x128xf32, #tpu.memory_space<vmem>>, vector<1x8x128xf32>
    %24 = vector.shape_cast %23 : vector<1x8x128xf32> to vector<8x128xf32>
    %c8_i32 = arith.constant 8 : i32
    %25 = arith.muli %arg1, %c8_i32 : i32
    %26 = tpu.assume_multiple %25, 8 : i32
    %27 = arith.index_cast %26 : i32 to index
    %c0_12 = arith.constant 0 : index
    %28 = vector.load %arg6[%27, %c0_12] : memref<64x128xf32, #tpu.memory_space<vmem>>, vector<8x128xf32>
    %c0_13 = arith.constant 0 : index
    %c0_14 = arith.constant 0 : index
    %29 = vector.load %arg5[%c0_13, %c0_14] : memref<2x128xf32, #tpu.memory_space<vmem>>, vector<1x128xf32>
    %c1 = arith.constant 1 : index
    %c0_15 = arith.constant 0 : index
    %30 = vector.load %arg5[%c1, %c0_15] : memref<2x128xf32, #tpu.memory_space<vmem>>, vector<1x128xf32>
    %31 = arith.subf %30, %29 : vector<1x128xf32>
    %c0_16 = arith.constant 0 : index
    %c0_17 = arith.constant 0 : index
    %c0_18 = arith.constant 0 : index
    %32 = vector.load %arg3[%c0_16, %c0_17, %c0_18] : memref<1x8x1xf32, #tpu.memory_space<vmem>>, vector<1x8x1xf32>
    %33 = vector.shape_cast %32 : vector<1x8x1xf32> to vector<8x1xf32>
    %34 = arith.addf %24, %28 : vector<8x128xf32>
    %35 = vector.broadcast %29 : vector<1x128xf32> to vector<8x128xf32>
    %36 = arith.addf %34, %35 : vector<8x128xf32>
    %37 = vector.broadcast %33 : vector<8x1xf32> to vector<8x128xf32>
    %38 = vector.broadcast %31 : vector<1x128xf32> to vector<8x128xf32>
    %39 = arith.mulf %37, %38 : vector<8x128xf32>
    %40 = arith.addf %36, %39 : vector<8x128xf32>
    %cst = arith.constant dense<0.000000e+00> : vector<8xf32>
    %41 = vector.multi_reduction <add>, %40, %cst [1] : vector<8x128xf32> to vector<8xf32>
    %42 = vector.shape_cast %41 : vector<8xf32> to vector<8x1xf32>
    %43 = arith.mulf %40, %40 : vector<8x128xf32>
    %cst_19 = arith.constant dense<0.000000e+00> : vector<8xf32>
    %44 = vector.multi_reduction <add>, %43, %cst_19 [1] : vector<8x128xf32> to vector<8xf32>
    %45 = vector.shape_cast %44 : vector<8xf32> to vector<8x1xf32>
    %cst_20 = arith.constant 7.812500e-03 : f32
    %46 = vector.broadcast %cst_20 : f32 to vector<8x1xf32>
    %47 = arith.mulf %42, %46 : vector<8x1xf32>
    %cst_21 = arith.constant 7.812500e-03 : f32
    %48 = vector.broadcast %cst_21 : f32 to vector<8x1xf32>
    %49 = arith.mulf %45, %48 : vector<8x1xf32>
    %50 = arith.mulf %47, %47 : vector<8x1xf32>
    %51 = arith.subf %49, %50 : vector<8x1xf32>
    %cst_22 = arith.constant 0.000000e+00 : f32
    %52 = vector.broadcast %cst_22 : f32 to vector<8x1xf32>
    %53 = arith.maximumf %51, %52 : vector<8x1xf32>
    %54 = vector.broadcast %47 : vector<8x1xf32> to vector<8x128xf32>
    %55 = arith.subf %40, %54 : vector<8x128xf32>
    %cst_23 = arith.constant 9.99999996E-13 : f32
    %56 = vector.broadcast %cst_23 : f32 to vector<8x1xf32>
    %57 = arith.addf %53, %56 : vector<8x1xf32>
    %58 = math.rsqrt %57 : vector<8x1xf32>
    %59 = vector.broadcast %58 : vector<8x1xf32> to vector<8x128xf32>
    %60 = arith.mulf %55, %59 : vector<8x128xf32>
    %c0_24 = arith.constant 0 : index
    %c0_25 = arith.constant 0 : index
    %61 = vector.load %arg7[%c0_24, %c0_25] : memref<1x128xf32, #tpu.memory_space<vmem>>, vector<1x128xf32>
    %62 = vector.broadcast %61 : vector<1x128xf32> to vector<8x128xf32>
    %63 = arith.mulf %60, %62 : vector<8x128xf32>
    %c0_26 = arith.constant 0 : index
    %c0_27 = arith.constant 0 : index
    %64 = vector.load %arg8[%c0_26, %c0_27] : memref<1x128xf32, #tpu.memory_space<vmem>>, vector<1x128xf32>
    %65 = vector.broadcast %64 : vector<1x128xf32> to vector<8x128xf32>
    %66 = arith.addf %63, %65 : vector<8x128xf32>
    %67 = vector.shape_cast %66 : vector<8x128xf32> to vector<1x8x128xf32>
    %c0_28 = arith.constant 0 : index
    %c0_29 = arith.constant 0 : index
    %c0_30 = arith.constant 0 : index
    %68 = vector.load %arg9[%c0_28, %c0_29, %c0_30] : memref<1x8x128xf32, #tpu.memory_space<vmem>>, vector<1x8x128xf32>
    tpu.vector_store %arg9[%c0_28, %c0_29, %c0_30], %67 {strides = array<i32>} : memref<1x8x128xf32, #tpu.memory_space<vmem>>, vector<1x8x128xf32>,
    return
  }
  func.func @transform_0(%arg0: i32, %arg1: i32, %arg2: memref<64xi32, #tpu.memory_space<smem>>) -> (i32, i32, i32) {
    %c0_i32 = arith.constant 0 : i32
    %c0_i32_0 = arith.constant 0 : i32
    return %arg0, %arg1, %c0_i32 : i32, i32, i32
  }
  func.func @transform_2(%arg0: i32, %arg1: i32, %arg2: memref<64xi32, #tpu.memory_space<smem>>) -> (i32, i32) {
    %c0_i32 = arith.constant 0 : i32
    %c0_i32_0 = arith.constant 0 : i32
    %c0_i32_1 = arith.constant 0 : i32
    return %c0_i32, %c0_i32_0 : i32, i32
  }
  func.func @transform_3(%arg0: i32, %arg1: i32, %arg2: memref<64xi32, #tpu.memory_space<smem>>) -> (i32, i32) {
    %c0_i32 = arith.constant 0 : i32
    %c0_i32_0 = arith.constant 0 : i32
    %c0_i32_1 = arith.constant 0 : i32
    return %c0_i32, %c0_i32_0 : i32, i32
  }
  func.func @transform_4(%arg0: i32, %arg1: i32, %arg2: memref<64xi32, #tpu.memory_space<smem>>) -> (i32, i32) {
    %c0_i32 = arith.constant 0 : i32
    %c0_i32_0 = arith.constant 0 : i32
    %c0_i32_1 = arith.constant 0 : i32
    return %c0_i32, %c0_i32_0 : i32, i32
  }
  func.func @transform_5(%arg0: i32, %arg1: i32, %arg2: memref<64xi32, #tpu.memory_space<smem>>) -> (i32, i32) {
    %c0_i32 = arith.constant 0 : i32
    %c0_i32_0 = arith.constant 0 : i32
    %c0_i32_1 = arith.constant 0 : i32
    return %c0_i32, %c0_i32_0 : i32, i32
  }
  func.func @transform_6(%arg0: i32, %arg1: i32, %arg2: memref<64xi32, #tpu.memory_space<smem>>) -> (i32, i32, i32) {
    %c0_i32 = arith.constant 0 : i32
    %c0_i32_0 = arith.constant 0 : i32
    return %arg0, %arg1, %c0_i32 : i32, i32, i32
  }
}

</mosaic_0001>

<llo_original>
// kernel: tpu_custom_call.1
$region0: #{tpu_custom_call.1}
  #allocation0 [shape = 'u32[]', space=smem, size = 0x4, offset = 0x4, fixed_abs, tag = 'smem constant byte address 0x4 - core index']
  #allocation1 [shape = 'u32[144,128]{1,0:T(1,128)}', space=vmem, size = 0x12000, scoped, tag = 'internal scratch']
  #allocation2 [shape = 'f32[2,8,128]{2,1,0:T(8,128)}', space=vmem, size = 0x2000, scoped, tag = 'scratch operand']
  #allocation3 [shape = 's32[2]{0}', space=sflag, size = 0x8, scoped, tag = 'scratch operand']
  #allocation4 [shape = 's32[1]{0}', space=sflag, size = 0x4, scoped, tag = 'scoped memory for tpu_custom_call.1']
  #allocation5 [shape = 'u8[512]{0}', space=smem, size = 0x200, scoped, tag = 'prefetched SMEM operand 0']
  #allocation8 [shape = 's32[]', space=sflag, size = 0x4, offset = 0, fixed_abs, tag = 'sflag constant byte address 0x0 - dummy sync flag']
  #allocation9 [shape = 's32[]', space=sflag, size = 0x4, offset = 0, fixed_abs, tag = 'sflag constant byte address 0x0 - dummy sync flag']
  #allocation10 [shape = 'u32[]', space=smem, size = 0x4, offset = 0x44, fixed_abs, tag = 'smem constant byte address 0x44 - assertion arg 0']
  #allocation11 [shape = 'u32[]', space=smem, size = 0x4, offset = 0x48, fixed_abs, tag = 'smem constant byte address 0x48 - assertion arg 1']
  #allocation12 [shape = 's32[]', space=sflag, size = 0x4, offset = 0, fixed_abs, tag = 'sflag constant byte address 0x0 - dummy sync flag']
  #allocation13 [shape = 's32[]', space=sflag, size = 0x4, offset = 0, fixed_abs, tag = 'sflag constant byte address 0x0 - dummy sync flag']
  #allocation14 [shape = 's32[]', space=sflag, size = 0x4, offset = 0, fixed_abs, tag = 'sflag constant byte address 0x0 - dummy sync flag']
  #allocation15 [shape = 's32[]', space=sflag, size = 0x4, offset = 0, fixed_abs, tag = 'sflag constant byte address 0x0 - dummy sync flag']
  #allocation16 [shape = 's32[]', space=sflag, size = 0x4, offset = 0, fixed_abs, tag = 'sflag constant byte address 0x0 - dummy sync flag']
  #allocation17 [shape = 's32[]', space=sflag, size = 0x4, offset = 0, fixed_abs, tag = 'sflag constant byte address 0x0 - dummy sync flag']
  #allocation18 [shape = 's32[]', space=sflag, size = 0x4, offset = 0, fixed_abs, tag = 'sflag constant byte address 0x0 - dummy sync flag']
  #allocation19 [shape = 's32[]', space=sflag, size = 0x4, offset = 0, fixed_abs, tag = 'sflag constant byte address 0x0 - dummy sync flag']
  #allocation20 [shape = 's32[]', space=sflag, size = 0x4, offset = 0, fixed_abs, tag = 'sflag constant byte address 0x0 - dummy sync flag']
  #allocation21 [shape = 's32[]', space=sflag, size = 0x4, offset = 0, fixed_abs, tag = 'sflag constant byte address 0x0 - dummy sync flag']
  #allocation22 [shape = 's32[]', space=sflag, size = 0x4, offset = 0, fixed_abs, tag = 'sflag constant byte address 0x0 - dummy sync flag']
  #allocation23 [shape = 's32[]', space=sflag, size = 0x4, offset = 0, fixed_abs, tag = 'sflag constant byte address 0x0 - dummy sync flag']
  #allocation24 [shape = 's32[]', space=sflag, size = 0x4, offset = 0, fixed_abs, tag = 'sflag constant byte address 0x0 - dummy sync flag']
  #allocation25 [shape = 's32[]', space=sflag, size = 0x4, offset = 0, fixed_abs, tag = 'sflag constant byte address 0x0 - dummy sync flag']
  #allocation26 [shape = 's32[]', space=sflag, size = 0x4, offset = 0, fixed_abs, tag = 'sflag constant byte address 0x0 - dummy sync flag']
  #allocation27 [shape = 's32[]', space=sflag, size = 0x4, offset = 0, fixed_abs, tag = 'sflag constant byte address 0x0 - dummy sync flag']
  #allocation28 [shape = 's32[]', space=sflag, size = 0x4, offset = 0, fixed_abs, tag = 'sflag constant byte address 0x0 - dummy sync flag']
  #allocation29 [shape = 's32[]', space=sflag, size = 0x4, offset = 0, fixed_abs, tag = 'sflag constant byte address 0x0 - dummy sync flag']
  #allocation30 [shape = 's32[]', space=sflag, size = 0x4, offset = 0, fixed_abs, tag = 'sflag constant byte address 0x0 - dummy sync flag']
  #allocation31 [shape = 's32[]', space=sflag, size = 0x4, offset = 0, fixed_abs, tag = 'sflag constant byte address 0x0 - dummy sync flag']
  #allocation32 [shape = 's32[]', space=sflag, size = 0x4, offset = 0, fixed_abs, tag = 'sflag constant byte address 0x0 - dummy sync flag']
  #allocation33 [shape = 's32[]', space=sflag, size = 0x4, offset = 0, fixed_abs, tag = 'sflag constant byte address 0x0 - dummy sync flag']
  #allocation34 [shape = 's32[]', space=sflag, size = 0x4, offset = 0, fixed_abs, tag = 'sflag constant byte address 0x0 - dummy sync flag']
  #allocation35 [shape = 's32[]', space=sflag, size = 0x4, offset = 0, fixed_abs, tag = 'sflag constant byte address 0x0 - dummy sync flag']
  #allocation36 [shape = 's32[]', space=sflag, size = 0x4, offset = 0, fixed_abs, tag = 'sflag constant byte address 0x0 - dummy sync flag']
  #allocation37 [shape = 's32[]', space=sflag, size = 0x4, offset = 0, fixed_abs, tag = 'sflag constant byte address 0x0 - dummy sync flag']
  #allocation38 [shape = 's32[]', space=sflag, size = 0x4, offset = 0, fixed_abs, tag = 'sflag constant byte address 0x0 - dummy sync flag']
  #allocation39 [shape = 's32[]', space=sflag, size = 0x4, offset = 0, fixed_abs, tag = 'sflag constant byte address 0x0 - dummy sync flag']
  #allocation40 [shape = 's32[]', space=sflag, size = 0x4, offset = 0, fixed_abs, tag = 'sflag constant byte address 0x0 - dummy sync flag']
  #allocation41 [shape = 's32[]', space=sflag, size = 0x4, offset = 0, fixed_abs, tag = 'sflag constant byte address 0x0 - dummy sync flag']
  %s0 = inlined_call_operand.vmem [shape: s32[64], index: 0, kind: input, shape index: {}]
  %s1 = inlined_call_operand.vmem [shape: f32[2,32,1], index: 1, kind: input, shape index: {}]
  %s2 = inlined_call_operand.hbm [shape: f32[96,128], index: 2, kind: input, shape index: {}]
  %s3 = inlined_call_operand.vmem [shape: f32[2,128], index: 3, kind: input, shape index: {}]
  %s4 = inlined_call_operand.vmem [shape: f32[64,128], index: 4, kind: input, shape index: {}]
  %s5 = inlined_call_operand.vmem [shape: f32[1,128], index: 5, kind: input, shape index: {}]
  %s6 = inlined_call_operand.vmem [shape: f32[1,128], index: 6, kind: input, shape index: {}]
  %s7 = inlined_call_operand.hbm [shape: f32[2,32,128], index: 7, kind: output, shape index: {}]
  %s8 = sld [smem:[#allocation0]]
  $region125: #{tpu_custom_call.1} parent=0
    _
  %s10 = ssub.s32 1, %s8
  %s11 = scalar_select 0, %s10, %s8
  %s12 = sshll.u32 %s0, 4
  %s13 = int_to_ptr.vmem [resolvable:$true] %s12
  %15 = dma.vmem_to_smem %s13, 16, [#allocation5], [#allocation4]
  %16 = dma.done [#allocation4], 16
  %17 = sfence
  $region1: #{tpu_custom_call.1} parent=0
    #allocation6 [shape = 'u8[8192]{0}', space=vmem, size = 0x2000, scoped, tag = 'output window, operand 0']
    #allocation7 [shape = 's32[2]{0}', space=sflag, size = 0x8, scoped, tag = 'scoped memory for tpu_custom_call.1']
    %18 = vsyncpa [#allocation7], 0
    %s19 = scalar_lea.sflag [#allocation7], 1
    %20 = vsyncpa %s19, 0
    loop: start=0, step=1, limit=10
    $region2: #{tpu_custom_call.1} parent=1 // loop_pre_header
      _
    $region3: #{tpu_custom_call.1} parent=1 // loop_header
      %s22 = sphi 0, %s26
      %p23 = scmp.ge.s32.totalorder %s22, 10
      %s29 = sphi 0, %s41
      %s30 = sphi 0, %s37
      %s31 = sphi 0, %s29
      %s32 = sphi 0, %s30
      %s33 = sphi 0, %s31
      %s34 = sphi 0, %s32
      %s46 = sphi 0, %s48
      %s49 = sphi 0, %s46
      %s50 = sphi 0, %s49
      %s66 = sphi 0, %s50
      %s70 = sphi 0, %s70
      %s72 = sphi 0, %s70
      %s73 = sphi 0, %s72
      %s87 = sphi 0, %s73
      %s91 = sphi 0, %s91
      %s93 = sphi 0, %s91
      %s94 = sphi 0, %s93
      %s108 = sphi 0, %s94
      %s112 = sphi 0, %s112
      %s114 = sphi 0, %s112
      %s115 = sphi 0, %s114
      %s129 = sphi 0, %s115
      %s133 = sphi 0, %s133
      %s135 = sphi 0, %s133
      %s136 = sphi 0, %s135
      %s150 = sphi 0, %s136
      %s158 = sphi 0, %s160
      %s161 = sphi 0, %s158
      %s162 = sphi 0, %s161
      %s178 = sphi 0, %s162
    $region4: #{tpu_custom_call.1} parent=1 // loop_header_branch
      %25 = sbr.rel (%p23) target = $region8
    $region5: #{tpu_custom_call.1} parent=1 // loop_body
      %s27 = ssub.s32 %s22, 1
      %s28 = ssub.s32 %s22, 2
      %s35 = sadd.s32 1, %s30
      %p36 = scmp.ge.s32.totalorder %s35, 4
      %s37 = scalar_select %p36, 0, %s35
      %s38 = sadd.s32 1, %s29
      %s39 = scalar_select %p36, %s38, %s29
      %p40 = scmp.ge.s32.totalorder %s39, 2
      %s41 = scalar_select %p40, 0, %s39
      %s42 = ssub.s32 %s29, %s41
      %s43 = ssub.s32 %s30, %s37
      %s44 = sor.u32 %s42, %s43
      %p45 = scmp.eq.s32.totalorder %s44, 0
      %s47 = sadd.s32 %s46, 1
      %s48 = scalar_select %p45, %s46, %s47
      %p51 = pneg %p45
      %p52 = scmp.eq.s32.totalorder %s22, 7
      %p53 = por %p51, %p52
      %p54 = scmp.ne.s32.totalorder %s46, %s49
      %p55 = scmp.eq.s32.totalorder %s22, 0
      %p56 = por %p54, %p55
      %p57 = scmp.ne.s32.totalorder %s46, %s49
      %p58 = scmp.eq.s32.totalorder %s27, 7
      %p59 = por %p57, %p58
      %p60 = scmp.ne.s32.totalorder %s49, %s50
      %p61 = scmp.eq.s32.totalorder %s27, 0
      %p62 = por %p60, %p61
      %p63 = scmp.ne.s32.totalorder %s49, %s50
      %p64 = scmp.eq.s32.totalorder %s28, 7
      %p65 = por %p63, %p64
      %p67 = scmp.ne.s32.totalorder %s50, %s66
      %p68 = scmp.eq.s32.totalorder %s28, 0
      %p69 = por %p67, %p68
      %s71 = sadd.s32 %s70, 1
      %p74 = scmp.eq.s32.totalorder %s22, 7
      %p75 = scmp.ne.s32.totalorder %s70, %s72
      %p76 = scmp.eq.s32.totalorder %s22, 0
      %p77 = por %p75, %p76
      %p78 = scmp.ne.s32.totalorder %s70, %s72
      %p79 = scmp.eq.s32.totalorder %s27, 7
      %p80 = por %p78, %p79
      %p81 = scmp.ne.s32.totalorder %s72, %s73
      %p82 = scmp.eq.s32.totalorder %s27, 0
      %p83 = por %p81, %p82
      %p84 = scmp.ne.s32.totalorder %s72, %s73
      %p85 = scmp.eq.s32.totalorder %s28, 7
      %p86 = por %p84, %p85
      %p88 = scmp.ne.s32.totalorder %s73, %s87
      %p89 = scmp.eq.s32.totalorder %s28, 0
      %p90 = por %p88, %p89
      %s92 = sadd.s32 %s91, 1
      %p95 = scmp.eq.s32.totalorder %s22, 7
      %p96 = scmp.ne.s32.totalorder %s91, %s93
      %p97 = scmp.eq.s32.totalorder %s22, 0
      %p98 = por %p96, %p97
      %p99 = scmp.ne.s32.totalorder %s91, %s93
      %p100 = scmp.eq.s32.totalorder %s27, 7
      %p101 = por %p99, %p100
      %p102 = scmp.ne.s32.totalorder %s93, %s94
      %p103 = scmp.eq.s32.totalorder %s27, 0
      %p104 = por %p102, %p103
      %p105 = scmp.ne.s32.totalorder %s93, %s94
      %p106 = scmp.eq.s32.totalorder %s28, 7
      %p107 = por %p105, %p106
      %p109 = scmp.ne.s32.totalorder %s94, %s108
      %p110 = scmp.eq.s32.totalorder %s28, 0
      %p111 = por %p109, %p110
      %s113 = sadd.s32 %s112, 1
      %p116 = scmp.eq.s32.totalorder %s22, 7
      %p117 = scmp.ne.s32.totalorder %s112, %s114
      %p118 = scmp.eq.s32.totalorder %s22, 0
      %p119 = por %p117, %p118
      %p120 = scmp.ne.s32.totalorder %s112, %s114
      %p121 = scmp.eq.s32.totalorder %s27, 7
      %p122 = por %p120, %p121
      %p123 = scmp.ne.s32.totalorder %s114, %s115
      %p124 = scmp.eq.s32.totalorder %s27, 0
      %p125 = por %p123, %p124
      %p126 = scmp.ne.s32.totalorder %s114, %s115
      %p127 = scmp.eq.s32.totalorder %s28, 7
      %p128 = por %p126, %p127
      %p130 = scmp.ne.s32.totalorder %s115, %s129
      %p131 = scmp.eq.s32.totalorder %s28, 0
      %p132 = por %p130, %p131
      %s134 = sadd.s32 %s133, 1
      %p137 = scmp.eq.s32.totalorder %s22, 7
      %p138 = scmp.ne.s32.totalorder %s133, %s135
      %p139 = scmp.eq.s32.totalorder %s22, 0
      %p140 = por %p138, %p139
      %p141 = scmp.ne.s32.totalorder %s133, %s135
      %p142 = scmp.eq.s32.totalorder %s27, 7
      %p143 = por %p141, %p142
      %p144 = scmp.ne.s32.totalorder %s135, %s136
      %p145 = scmp.eq.s32.totalorder %s27, 0
      %p146 = por %p144, %p145
      %p147 = scmp.ne.s32.totalorder %s135, %s136
      %p148 = scmp.eq.s32.totalorder %s28, 7
      %p149 = por %p147, %p148
      %p151 = scmp.ne.s32.totalorder %s136, %s150
      %p152 = scmp.eq.s32.totalorder %s28, 0
      %p153 = por %p151, %p152
      %s154 = ssub.s32 %s29, %s41
      %s155 = ssub.s32 %s30, %s37
      %s156 = sor.u32 %s154, %s155
      %p157 = scmp.eq.s32.totalorder %s156, 0
      %s159 = sadd.s32 %s158, 1
      %s160 = scalar_select %p157, %s158, %s159
      %p163 = pneg %p157
      %p164 = scmp.eq.s32.totalorder %s22, 7
      %p165 = por %p163, %p164
      %p166 = scmp.ne.s32.totalorder %s158, %s161
      %p167 = scmp.eq.s32.totalorder %s22, 0
      %p168 = por %p166, %p167
      %p169 = scmp.ne.s32.totalorder %s158, %s161
      %p170 = scmp.eq.s32.totalorder %s27, 7
      %p171 = por %p169, %p170
      %p172 = scmp.ne.s32.totalorder %s161, %s162
      %p173 = scmp.eq.s32.totalorder %s27, 0
      %p174 = por %p172, %p173
      %p175 = scmp.ne.s32.totalorder %s161, %s162
      %p176 = scmp.eq.s32.totalorder %s28, 7
      %p177 = por %p175, %p176
      %p179 = scmp.ne.s32.totalorder %s162, %s178
      %p180 = scmp.eq.s32.totalorder %s28, 0
      %p181 = por %p179, %p180
      %p182 = scmp.le.s32.totalorder 1, %s22
      %p183 = scmp.lt.s32.totalorder %s22, 9
      %p184 = pnand %p182, %p183
      %p185 = pneg %p184
      // Predicated region
      $region9: #{tpu_custom_call.1} parent=5 // pred_check
        _
      $region10: #{tpu_custom_call.1} parent=5 // pred_check_branch
        %187 = sbr.rel (%p184) target = $region12
      $region11: #{tpu_custom_call.1} parent=5 // pred_region
        %s188 = ssub.s32 %s22, 1
        // Predicated region
        $region13: #{tpu_custom_call.1} parent=11 // pred_check
          %p189 = pneg %p83
        $region14: #{tpu_custom_call.1} parent=11 // pred_check_branch
          %191 = sbr.rel (%p189) target = $region16
        $region15: #{tpu_custom_call.1} parent=11 // pred_region
          _
        $region16: #{tpu_custom_call.1} parent=11 // pred_fallthru
          _
        // Predicated region
        $region17: #{tpu_custom_call.1} parent=11 // pred_check
          %p192 = pneg %p104
        $region18: #{tpu_custom_call.1} parent=11 // pred_check_branch
          %194 = sbr.rel (%p192) target = $region20
        $region19: #{tpu_custom_call.1} parent=11 // pred_region
          _
        $region20: #{tpu_custom_call.1} parent=11 // pred_fallthru
          _
        // Predicated region
        $region21: #{tpu_custom_call.1} parent=11 // pred_check
          %p195 = pneg %p125
        $region22: #{tpu_custom_call.1} parent=11 // pred_check_branch
          %197 = sbr.rel (%p195) target = $region24
        $region23: #{tpu_custom_call.1} parent=11 // pred_region
          _
        $region24: #{tpu_custom_call.1} parent=11 // pred_fallthru
          _
        // Predicated region
        $region25: #{tpu_custom_call.1} parent=11 // pred_check
          %p198 = pneg %p146
        $region26: #{tpu_custom_call.1} parent=11 // pred_check_branch
          %200 = sbr.rel (%p198) target = $region28
        $region27: #{tpu_custom_call.1} parent=11 // pred_region
          _
        $region28: #{tpu_custom_call.1} parent=11 // pred_fallthru
          _
      $region12: #{tpu_custom_call.1} parent=5 // pred_fallthru
        _
      %p201 = scmp.lt.s32.totalorder %s22, 8
      // Predicated region
      $region29: #{tpu_custom_call.1} parent=5 // pred_check
        %p202 = pneg %p201
      $region30: #{tpu_custom_call.1} parent=5 // pred_check_branch
        %204 = sbr.rel (%p202) target = $region32
      $region31: #{tpu_custom_call.1} parent=5 // pred_region
        // Predicated region
        $region33: #{tpu_custom_call.1} parent=31 // pred_check
          %p205 = pneg %p56
        $region34: #{tpu_custom_call.1} parent=31 // pred_check_branch
          %207 = sbr.rel (%p205) target = $region36
        $region35: #{tpu_custom_call.1} parent=31 // pred_region
          %p208 = scmp.lt.s32.totalorder %s29, 1
          %s209 = scalar_select %p208, %s29, 1
          %p210 = scmp.lt.s32.totalorder %s30, 3
          %s211 = scalar_select %p210, %s30, 3
          %s212 = smul.addr %s209, 4
          %s213 = sadd.s32 %s211, %s212
          %s214 = smul.addr %s213, 8
          %s215 = scalar_lea.vmem %s1, %s214
        $region36: #{tpu_custom_call.1} parent=31 // pred_fallthru
          _
      $region32: #{tpu_custom_call.1} parent=5 // pred_fallthru
        _
      %p216 = scmp.le.s32.totalorder 1, %s22
      %p217 = scmp.lt.s32.totalorder %s22, 9
      %p218 = pnand %p216, %p217
      %p219 = pneg %p218
      // Predicated region
      $region37: #{tpu_custom_call.1} parent=5 // pred_check
        _
      $region38: #{tpu_custom_call.1} parent=5 // pred_check_branch
        %221 = sbr.rel (%p218) target = $region40
      $region39: #{tpu_custom_call.1} parent=5 // pred_region
        %s222 = ssub.s32 %s22, 1
        %p223 = scmp.lt.s32.totalorder %s31, 1
        %s224 = scalar_select %p223, %s31, 1
        %p225 = scmp.lt.s32.totalorder %s32, 3
        %s226 = scalar_select %p225, %s32, 3
        %s227 = smul.addr %s224, 4
        %s228 = sadd.s32 %s226, %s227
        %s229 = smul.addr %s228, 8
        %s230 = scalar_lea.vmem %s1, %s229
        %p231 = pneg %p62
        %p232 = pneg %p59
        %p233 = pneg %p83
        %p234 = pneg %p80
        %p235 = pneg %p104
        %p236 = pneg %p101
        %p237 = pneg %p125
        %p238 = pneg %p122
        %p239 = pneg %p146
        %p240 = pneg %p143
        %p241 = pneg %p174
        %p242 = pneg %p171
        %s243 = sand.u32 %s161, 1
        %s244 = scalar_lea.sflag [#allocation7], %s243
        %s245 = sand.u32 %s161, 1
        %s246 = smul.addr %s245, 8
        %s247 = scalar_lea.vmem [#allocation6], %s246
        %p248 = scmp.lt.s32.totalorder %s31, 1
        %s249 = scalar_select %p248, %s31, 1
        %p250 = scmp.lt.s32.totalorder %s32, 3
        %s251 = scalar_select %p250, %s32, 3
        %s252 = smul.addr %s249, 4
        %s253 = sadd.s32 %s251, %s252
        %s254 = smul.addr %s253, 8
        %s255 = scalar_lea.vmem %s1, %s254
        %p256 = scmp.lt.s32.totalorder %s32, 0
        %s257 = ssub.s32 0, %s32
        %s258 = scalar_select %p256, %s257, %s32
        %s259 = sand.u32 %s258, 1
        %s260 = ssub.s32 0, %s259
        %s261 = scalar_select %p256, %s260, %s259
        %p262 = scmp.ne.s32.totalorder %s261, 0
        %p263 = scmp.lt.s32.totalorder %s261, 0
        %p264 = pnand %p263, %p262
        %p265 = pneg %p264
        %s266 = sadd.s32 %s261, 2
        %s267 = scalar_select %p265, %s266, %s261
        %p268 = scmp.eq.s32.totalorder %s32, 0
        // Predicated region
        $region41: #{tpu_custom_call.1} parent=39 // pred_check
          %p269 = pneg %p268
        $region42: #{tpu_custom_call.1} parent=39 // pred_check_branch
          %271 = sbr.rel (%p269) target = $region44
        $region43: #{tpu_custom_call.1} parent=39 // pred_region
          %s272 = smul.u32 %s31, 32
          %s273 = smul.u32 %s32, 8
          %s274 = sadd.s32 %s272, %s273
          %s275 = sld [smem:[#allocation5 + %s274]]
          %s276 = smul.addr %s275, 16
          %s277 = scalar_lea.hbm %s2, %s276
          %s278 = smul.u32 %s267, 8
          %s279 = scalar_lea.vmem [#allocation2], %s278
          %s280 = scalar_lea.sflag [#allocation3], %s267
          // Predicated region
          $region45: #{tpu_custom_call.1} parent=43 // pred_check
            _
          $region46: #{tpu_custom_call.1} parent=43 // pred_check_branch
            %282 = sbr.rel target = $region48
          $region47: #{tpu_custom_call.1} parent=43 // pred_region
            %283 = sst [smem:[#allocation10]] [#allocation9]
            %284 = sst [smem:[#allocation11]] [#allocation8]
          $region48: #{tpu_custom_call.1} parent=43 // pred_fallthru
            _
          %286 = shalt.err (0)
          %s288 = sshll.u32 %s279, 4
          %s289 = int_to_ptr.vmem [resolvable:$true] %s288
          %291 = dma.hbm_to_vmem [thread:$0]  %s277, 16, %s289, %s280
          %s292 = sadd.s32 %s274, 1
          %s293 = sld [smem:[#allocation5 + %s292]]
          %s294 = smul.addr %s293, 16
          %s295 = scalar_lea.hbm %s2, %s294
          %s296 = sadd.s32 1, %s278
          %s297 = scalar_lea.vmem [#allocation2], %s296
          // Predicated region
          $region49: #{tpu_custom_call.1} parent=43 // pred_check
            _
          $region50: #{tpu_custom_call.1} parent=43 // pred_check_branch
            %299 = sbr.rel target = $region52
          $region51: #{tpu_custom_call.1} parent=43 // pred_region
            %300 = sst [smem:[#allocation10]] [#allocation13]
            %301 = sst [smem:[#allocation11]] [#allocation12]
          $region52: #{tpu_custom_call.1} parent=43 // pred_fallthru
            _
          %303 = shalt.err (0)
          %s305 = sshll.u32 %s297, 4
          %s306 = int_to_ptr.vmem [resolvable:$true] %s305
          %308 = dma.hbm_to_vmem [thread:$0]  %s295, 16, %s306, %s280
          %s309 = sadd.s32 %s274, 2
          %s310 = sld [smem:[#allocation5 + %s309]]
          %s311 = smul.addr %s310, 16
          %s312 = scalar_lea.hbm %s2, %s311
          %s313 = sadd.s32 2, %s278
          %s314 = scalar_lea.vmem [#allocation2], %s313
          // Predicated region
          $region53: #{tpu_custom_call.1} parent=43 // pred_check
            _
          $region54: #{tpu_custom_call.1} parent=43 // pred_check_branch
            %316 = sbr.rel target = $region56
          $region55: #{tpu_custom_call.1} parent=43 // pred_region
            %317 = sst [smem:[#allocation10]] [#allocation15]
            %318 = sst [smem:[#allocation11]] [#allocation14]
          $region56: #{tpu_custom_call.1} parent=43 // pred_fallthru
            _
          %320 = shalt.err (0)
          %s322 = sshll.u32 %s314, 4
          %s323 = int_to_ptr.vmem [resolvable:$true] %s322
          %325 = dma.hbm_to_vmem [thread:$0]  %s312, 16, %s323, %s280
          %s326 = sadd.s32 %s274, 3
          %s327 = sld [smem:[#allocation5 + %s326]]
          %s328 = smul.addr %s327, 16
          %s329 = scalar_lea.hbm %s2, %s328
          %s330 = sadd.s32 3, %s278
          %s331 = scalar_lea.vmem [#allocation2], %s330
          // Predicated region
          $region57: #{tpu_custom_call.1} parent=43 // pred_check
            _
          $region58: #{tpu_custom_call.1} parent=43 // pred_check_branch
            %333 = sbr.rel target = $region60
          $region59: #{tpu_custom_call.1} parent=43 // pred_region
            %334 = sst [smem:[#allocation10]] [#allocation17]
            %335 = sst [smem:[#allocation11]] [#allocation16]
          $region60: #{tpu_custom_call.1} parent=43 // pred_fallthru
            _
          %337 = shalt.err (0)
          %s339 = sshll.u32 %s331, 4
          %s340 = int_to_ptr.vmem [resolvable:$true] %s339
          %342 = dma.hbm_to_vmem [thread:$0]  %s329, 16, %s340, %s280
          %s343 = sadd.s32 %s274, 4
          %s344 = sld [smem:[#allocation5 + %s343]]
          %s345 = smul.addr %s344, 16
          %s346 = scalar_lea.hbm %s2, %s345
          %s347 = sadd.s32 4, %s278
          %s348 = scalar_lea.vmem [#allocation2], %s347
          // Predicated region
          $region61: #{tpu_custom_call.1} parent=43 // pred_check
            _
          $region62: #{tpu_custom_call.1} parent=43 // pred_check_branch
            %350 = sbr.rel target = $region64
          $region63: #{tpu_custom_call.1} parent=43 // pred_region
            %351 = sst [smem:[#allocation10]] [#allocation19]
            %352 = sst [smem:[#allocation11]] [#allocation18]
          $region64: #{tpu_custom_call.1} parent=43 // pred_fallthru
            _
          %354 = shalt.err (0)
          %s356 = sshll.u32 %s348, 4
          %s357 = int_to_ptr.vmem [resolvable:$true] %s356
          %359 = dma.hbm_to_vmem [thread:$0]  %s346, 16, %s357, %s280
          %s360 = sadd.s32 %s274, 5
          %s361 = sld [smem:[#allocation5 + %s360]]
          %s362 = smul.addr %s361, 16
          %s363 = scalar_lea.hbm %s2, %s362
          %s364 = sadd.s32 5, %s278
          %s365 = scalar_lea.vmem [#allocation2], %s364
          // Predicated region
          $region65: #{tpu_custom_call.1} parent=43 // pred_check
            _
          $region66: #{tpu_custom_call.1} parent=43 // pred_check_branch
            %367 = sbr.rel target = $region68
          $region67: #{tpu_custom_call.1} parent=43 // pred_region
            %368 = sst [smem:[#allocation10]] [#allocation21]
            %369 = sst [smem:[#allocation11]] [#allocation20]
          $region68: #{tpu_custom_call.1} parent=43 // pred_fallthru
            _
          %371 = shalt.err (0)
          %s373 = sshll.u32 %s365, 4
          %s374 = int_to_ptr.vmem [resolvable:$true] %s373
          %376 = dma.hbm_to_vmem [thread:$0]  %s363, 16, %s374, %s280
          %s377 = sadd.s32 %s274, 6
          %s378 = sld [smem:[#allocation5 + %s377]]
          %s379 = smul.addr %s378, 16
          %s380 = scalar_lea.hbm %s2, %s379
          %s381 = sadd.s32 6, %s278
          %s382 = scalar_lea.vmem [#allocation2], %s381
          // Predicated region
          $region69: #{tpu_custom_call.1} parent=43 // pred_check
            _
          $region70: #{tpu_custom_call.1} parent=43 // pred_check_branch
            %384 = sbr.rel target = $region72
          $region71: #{tpu_custom_call.1} parent=43 // pred_region
            %385 = sst [smem:[#allocation10]] [#allocation23]
            %386 = sst [smem:[#allocation11]] [#allocation22]
          $region72: #{tpu_custom_call.1} parent=43 // pred_fallthru
            _
          %388 = shalt.err (0)
          %s390 = sshll.u32 %s382, 4
          %s391 = int_to_ptr.vmem [resolvable:$true] %s390
          %393 = dma.hbm_to_vmem [thread:$0]  %s380, 16, %s391, %s280
          %s394 = sadd.s32 %s274, 7
          %s395 = sld [smem:[#allocation5 + %s394]]
          %s396 = smul.addr %s395, 16
          %s397 = scalar_lea.hbm %s2, %s396
          %s398 = sadd.s32 7, %s278
          %s399 = scalar_lea.vmem [#allocation2], %s398
          // Predicated region
          $region73: #{tpu_custom_call.1} parent=43 // pred_check
            _
          $region74: #{tpu_custom_call.1} parent=43 // pred_check_branch
            %401 = sbr.rel target = $region76
          $region75: #{tpu_custom_call.1} parent=43 // pred_region
            %402 = sst [smem:[#allocation10]] [#allocation25]
            %403 = sst [smem:[#allocation11]] [#allocation24]
          $region76: #{tpu_custom_call.1} parent=43 // pred_fallthru
            _
          %405 = shalt.err (0)
          %s407 = sshll.u32 %s399, 4
          %s408 = int_to_ptr.vmem [resolvable:$true] %s407
          %410 = dma.hbm_to_vmem [thread:$0]  %s397, 16, %s408, %s280
        $region44: #{tpu_custom_call.1} parent=39 // pred_fallthru
          _
        %s411 = sadd.s32 %s32, 1
        %p412 = scmp.lt.s32.totalorder %s411, 4
        // Predicated region
        $region77: #{tpu_custom_call.1} parent=39 // pred_check
          %p413 = pneg %p412
        $region78: #{tpu_custom_call.1} parent=39 // pred_check_branch
          %415 = sbr.rel (%p413) target = $region80
        $region79: #{tpu_custom_call.1} parent=39 // pred_region
          %s416 = ssub.s32 1, %s267
          %s417 = smul.u32 %s31, 32
          %s418 = smul.u32 %s411, 8
          %s419 = sadd.s32 %s417, %s418
          %s420 = sld [smem:[#allocation5 + %s419]]
          %s421 = smul.addr %s420, 16
          %s422 = scalar_lea.hbm %s2, %s421
          %s423 = smul.u32 %s416, 8
          %s424 = scalar_lea.vmem [#allocation2], %s423
          %s425 = scalar_lea.sflag [#allocation3], %s416
          // Predicated region
          $region81: #{tpu_custom_call.1} parent=79 // pred_check
            _
          $region82: #{tpu_custom_call.1} parent=79 // pred_check_branch
            %427 = sbr.rel target = $region84
          $region83: #{tpu_custom_call.1} parent=79 // pred_region
            %428 = sst [smem:[#allocation10]] [#allocation27]
            %429 = sst [smem:[#allocation11]] [#allocation26]
          $region84: #{tpu_custom_call.1} parent=79 // pred_fallthru
            _
          %431 = shalt.err (0)
          %s433 = sshll.u32 %s424, 4
          %s434 = int_to_ptr.vmem [resolvable:$true] %s433
          %436 = dma.hbm_to_vmem [thread:$0]  %s422, 16, %s434, %s425
          %s437 = sadd.s32 %s419, 1
          %s438 = sld [smem:[#allocation5 + %s437]]
          %s439 = smul.addr %s438, 16
          %s440 = scalar_lea.hbm %s2, %s439
          %s441 = sadd.s32 1, %s423
          %s442 = scalar_lea.vmem [#allocation2], %s441
          // Predicated region
          $region85: #{tpu_custom_call.1} parent=79 // pred_check
            _
          $region86: #{tpu_custom_call.1} parent=79 // pred_check_branch
            %444 = sbr.rel target = $region88
          $region87: #{tpu_custom_call.1} parent=79 // pred_region
            %445 = sst [smem:[#allocation10]] [#allocation29]
            %446 = sst [smem:[#allocation11]] [#allocation28]
          $region88: #{tpu_custom_call.1} parent=79 // pred_fallthru
            _
          %448 = shalt.err (0)
          %s450 = sshll.u32 %s442, 4
          %s451 = int_to_ptr.vmem [resolvable:$true] %s450
          %453 = dma.hbm_to_vmem [thread:$0]  %s440, 16, %s451, %s425
          %s454 = sadd.s32 %s419, 2
          %s455 = sld [smem:[#allocation5 + %s454]]
          %s456 = smul.addr %s455, 16
          %s457 = scalar_lea.hbm %s2, %s456
          %s458 = sadd.s32 2, %s423
          %s459 = scalar_lea.vmem [#allocation2], %s458
          // Predicated region
          $region89: #{tpu_custom_call.1} parent=79 // pred_check
            _
          $region90: #{tpu_custom_call.1} parent=79 // pred_check_branch
            %461 = sbr.rel target = $region92
          $region91: #{tpu_custom_call.1} parent=79 // pred_region
            %462 = sst [smem:[#allocation10]] [#allocation31]
            %463 = sst [smem:[#allocation11]] [#allocation30]
          $region92: #{tpu_custom_call.1} parent=79 // pred_fallthru
            _
          %465 = shalt.err (0)
          %s467 = sshll.u32 %s459, 4
          %s468 = int_to_ptr.vmem [resolvable:$true] %s467
          %470 = dma.hbm_to_vmem [thread:$0]  %s457, 16, %s468, %s425
          %s471 = sadd.s32 %s419, 3
          %s472 = sld [smem:[#allocation5 + %s471]]
          %s473 = smul.addr %s472, 16
          %s474 = scalar_lea.hbm %s2, %s473
          %s475 = sadd.s32 3, %s423
          %s476 = scalar_lea.vmem [#allocation2], %s475
          // Predicated region
          $region93: #{tpu_custom_call.1} parent=79 // pred_check
            _
          $region94: #{tpu_custom_call.1} parent=79 // pred_check_branch
            %478 = sbr.rel target = $region96
          $region95: #{tpu_custom_call.1} parent=79 // pred_region
            %479 = sst [smem:[#allocation10]] [#allocation33]
            %480 = sst [smem:[#allocation11]] [#allocation32]
          $region96: #{tpu_custom_call.1} parent=79 // pred_fallthru
            _
          %482 = shalt.err (0)
          %s484 = sshll.u32 %s476, 4
          %s485 = int_to_ptr.vmem [resolvable:$true] %s484
          %487 = dma.hbm_to_vmem [thread:$0]  %s474, 16, %s485, %s425
          %s488 = sadd.s32 %s419, 4
          %s489 = sld [smem:[#allocation5 + %s488]]
          %s490 = smul.addr %s489, 16
          %s491 = scalar_lea.hbm %s2, %s490
          %s492 = sadd.s32 4, %s423
          %s493 = scalar_lea.vmem [#allocation2], %s492
          // Predicated region
          $region97: #{tpu_custom_call.1} parent=79 // pred_check
            _
          $region98: #{tpu_custom_call.1} parent=79 // pred_check_branch
            %495 = sbr.rel target = $region100
          $region99: #{tpu_custom_call.1} parent=79 // pred_region
            %496 = sst [smem:[#allocation10]] [#allocation35]
            %497 = sst [smem:[#allocation11]] [#allocation34]
          $region100: #{tpu_custom_call.1} parent=79 // pred_fallthru
            _
          %499 = shalt.err (0)
          %s501 = sshll.u32 %s493, 4
          %s502 = int_to_ptr.vmem [resolvable:$true] %s501
          %504 = dma.hbm_to_vmem [thread:$0]  %s491, 16, %s502, %s425
          %s505 = sadd.s32 %s419, 5
          %s506 = sld [smem:[#allocation5 + %s505]]
          %s507 = smul.addr %s506, 16
          %s508 = scalar_lea.hbm %s2, %s507
          %s509 = sadd.s32 5, %s423
          %s510 = scalar_lea.vmem [#allocation2], %s509
          // Predicated region
          $region101: #{tpu_custom_call.1} parent=79 // pred_check
            _
          $region102: #{tpu_custom_call.1} parent=79 // pred_check_branch
            %512 = sbr.rel target = $region104
          $region103: #{tpu_custom_call.1} parent=79 // pred_region
            %513 = sst [smem:[#allocation10]] [#allocation37]
            %514 = sst [smem:[#allocation11]] [#allocation36]
          $region104: #{tpu_custom_call.1} parent=79 // pred_fallthru
            _
          %516 = shalt.err (0)
          %s518 = sshll.u32 %s510, 4
          %s519 = int_to_ptr.vmem [resolvable:$true] %s518
          %521 = dma.hbm_to_vmem [thread:$0]  %s508, 16, %s519, %s425
          %s522 = sadd.s32 %s419, 6
          %s523 = sld [smem:[#allocation5 + %s522]]
          %s524 = smul.addr %s523, 16
          %s525 = scalar_lea.hbm %s2, %s524
          %s526 = sadd.s32 6, %s423
          %s527 = scalar_lea.vmem [#allocation2], %s526
          // Predicated region
          $region105: #{tpu_custom_call.1} parent=79 // pred_check
            _
          $region106: #{tpu_custom_call.1} parent=79 // pred_check_branch
            %529 = sbr.rel target = $region108
          $region107: #{tpu_custom_call.1} parent=79 // pred_region
            %530 = sst [smem:[#allocation10]] [#allocation39]
            %531 = sst [smem:[#allocation11]] [#allocation38]
          $region108: #{tpu_custom_call.1} parent=79 // pred_fallthru
            _
          %533 = shalt.err (0)
          %s535 = sshll.u32 %s527, 4
          %s536 = int_to_ptr.vmem [resolvable:$true] %s535
          %538 = dma.hbm_to_vmem [thread:$0]  %s525, 16, %s536, %s425
          %s539 = sadd.s32 %s419, 7
          %s540 = sld [smem:[#allocation5 + %s539]]
          %s541 = smul.addr %s540, 16
          %s542 = scalar_lea.hbm %s2, %s541
          %s543 = sadd.s32 7, %s423
          %s544 = scalar_lea.vmem [#allocation2], %s543
          // Predicated region
          $region109: #{tpu_custom_call.1} parent=79 // pred_check
            _
          $region110: #{tpu_custom_call.1} parent=79 // pred_check_branch
            %546 = sbr.rel target = $region112
          $region111: #{tpu_custom_call.1} parent=79 // pred_region
            %547 = sst [smem:[#allocation10]] [#allocation41]
            %548 = sst [smem:[#allocation11]] [#allocation40]
          $region112: #{tpu_custom_call.1} parent=79 // pred_fallthru
            _
          %550 = shalt.err (0)
          %s552 = sshll.u32 %s544, 4
          %s553 = int_to_ptr.vmem [resolvable:$true] %s552
          %555 = dma.hbm_to_vmem [thread:$0]  %s542, 16, %s553, %s425
        $region80: #{tpu_custom_call.1} parent=39 // pred_fallthru
          _
        %s556 = smul.u32 %s267, 8
        %s557 = scalar_lea.vmem [#allocation2], %s556
        %s558 = scalar_lea.sflag [#allocation3], %s267
        %s559 = smul.u32 8, 1
        %s560 = sshll.u32 %s559, 4
        %561 = dma.done %s558, %s560
        %v562 = vld [vmem:[%s557] sm:$0xff]
        %s563 = smul.u32 %s32, 8
        %s564 = scalar_lea.vmem %s4, %s563
        %v565 = vld [vmem:[%s564] sm:$0xff]
        %v566 = vld [vmem:[%s3] sm:$0x1]
        %v567 = vld [vmem:[%s3 + $0x1] sm:$0x1]
        %v568 = vsub.f32 %v567, %v566
        %v569 = vld [vmem:[%s255] sm:$0xff]
        %v570 = vadd.f32 %v562, %v565
        %v571 = vlaneseq
        %v572 = vshrl.u32 %v571, 7
        %v573 = vsub.s32 0, %v572
        %v574 = vrot.slane %v566, %v573
        %v575 = vadd.f32 %v570, %v574
        %577 = vset.pattern.permute.xlu0 0
        %578 = vperm.xlu0 %577, %v569
        %v579 = vpop.permute.xlu0 %578
        %v581 = vlaneseq
        %v582 = vshrl.u32 %v581, 7
        %v583 = vsub.s32 0, %v582
        %v584 = vrot.slane %v568, %v583
        %v585 = vmul.f32 %v579, %v584
        %v586 = vadd.f32 %v575, %v585
        %587 = vadd.xlane.f32.xlu0 %v586
        %v588 = vpop.xlane.xlu0 %587
        %v589 = vmul.f32 %v586, %v586
        %590 = vadd.xlane.f32.xlu0 %v589
        %v591 = vpop.xlane.xlu0 %590
        %v592 = vmul.f32 %v588, 0.0078125
        %v593 = vmul.f32 %v591, 0.0078125
        %v594 = vmul.f32 %v592, %v592
        %v595 = vsub.f32 %v593, %v594
        %v596 = vmax.f32 %v595, 0.0
        %v597 = vsub.f32 %v586, %v592
        %v598 = vadd.f32 %v596, 1e-12
        %v599 = vrsqrt.pop %v598
        %v600 = vmul.f32 %v597, %v599
        %v601 = vld [vmem:[%s5] sm:$0x1]
        %v603 = vlaneseq
        %v604 = vshrl.u32 %v603, 7
        %v605 = vsub.s32 0, %v604
        %v606 = vrot.slane %v601, %v605
        %v608 = vmul.f32 %v600, %v606
        %v609 = vld [vmem:[%s6] sm:$0x1]
        %v611 = vlaneseq
        %v612 = vshrl.u32 %v611, 7
        %v613 = vsub.s32 0, %v612
        %v614 = vrot.slane %v609, %v613
        %v616 = vadd.f32 %v608, %v614
        %617 = vst [vmem:[%s247] sm:$0xff] %v616
        %s618 = sand.u32 %s161, 1
        %s619 = scalar_lea.sflag [#allocation7], %s618
        %s620 = sand.u32 %s161, 1
        %s621 = smul.addr %s620, 8
        %s622 = scalar_lea.vmem [#allocation6], %s621
        // Predicated region
        $region113: #{tpu_custom_call.1} parent=39 // pred_check
          %p623 = pneg %p171
        $region114: #{tpu_custom_call.1} parent=39 // pred_check_branch
          %625 = sbr.rel (%p623) target = $region116
        $region115: #{tpu_custom_call.1} parent=39 // pred_region
          %s627 = ssub.s32 128, 128
          %628 = vsyncadd %s619, %s627
          %s629 = smul.addr %s31, 4
          %s630 = sadd.s32 %s32, %s629
          %s631 = smul.addr %s630, 128
          %s632 = scalar_lea.hbm %s7, %s631
          %s634 = sshll.u32 %s622, 4
          %s635 = int_to_ptr.vmem [resolvable:$true] %s634
          %637 = dma.vmem_to_hbm [thread:$0]  %s635, 128, %s632, %s619
        $region116: #{tpu_custom_call.1} parent=39 // pred_fallthru
          _
      $region40: #{tpu_custom_call.1} parent=5 // pred_fallthru
        _
      %p638 = scmp.le.s32.totalorder 2, %s22
      // Predicated region
      $region117: #{tpu_custom_call.1} parent=5 // pred_check
        %p639 = pneg %p638
      $region118: #{tpu_custom_call.1} parent=5 // pred_check_branch
        %641 = sbr.rel (%p639) target = $region120
      $region119: #{tpu_custom_call.1} parent=5 // pred_region
        %s642 = ssub.s32 %s22, 2
        // Predicated region
        $region121: #{tpu_custom_call.1} parent=119 // pred_check
          %p643 = pneg %p177
        $region122: #{tpu_custom_call.1} parent=119 // pred_check_branch
          %645 = sbr.rel (%p643) target = $region124
        $region123: #{tpu_custom_call.1} parent=119 // pred_region
          %s646 = sand.u32 %s162, 1
          %s647 = scalar_lea.sflag [#allocation7], %s646
          %s648 = sand.u32 %s162, 1
          %s649 = smul.addr %s648, 8
          %s650 = scalar_lea.vmem [#allocation6], %s649
          %651 = dma.done %s647, 128
        $region124: #{tpu_custom_call.1} parent=119 // pred_fallthru
          _
      $region120: #{tpu_custom_call.1} parent=5 // pred_fallthru
        _
    $region6: #{tpu_custom_call.1} parent=1 // loop_footer
      %s26 = sadd.s32 1, %s22
    $region7: #{tpu_custom_call.1} parent=1 // loop_footer_branch
      %21 = sbr.rel target = $region3
    $region8: #{tpu_custom_call.1} parent=1 // loop_exit
      _
    %652 = vsyncpa [#allocation7], 1
    %s653 = scalar_lea.sflag [#allocation7], 1
    %654 = vsyncpa %s653, 1
  %655 = vsyncmov [#allocation3]
  %s656 = vpop.sfrf %655
  %p657 = scmp.eq.s32.totalorder %s656, 0
  %p658 = pneg %p657
  %660 = shalt.err (%p658)
  %s661 = scalar_lea.sflag [#allocation3], 1
  %662 = vsyncmov %s661
  %s663 = vpop.sfrf %662
  %p664 = scmp.eq.s32.totalorder %s663, 0
  %p665 = pneg %p664
  %667 = shalt.err (%p665)

</llo_original>
